<compile_context>
chip_gen: v6e
topology: v6e:2x2x1
jax: 0.10.0
libtpu: 0.0.40
codegen_flags: <defaults>
</compile_context>

<pallas_src>
import functools

import numpy as np
import jax
import jax.numpy as jnp
from jax import lax
from jax.experimental import pallas as pl
from jax.experimental.pallas import tpu as pltpu

_MIB = 1024 * 1024


# ---------------------------------------------------------------------------
# Host-side constants (cached per period).
# ---------------------------------------------------------------------------
@functools.lru_cache(maxsize=16)
def _fused_dft_basis(period: int):
    """CS = [C | S], C[k,n]=cos(2*pi*k*n/P), S[k,n]=sin(2*pi*k*n/P), (P, 2P).

    Built in float64 with the angle reduced mod P so the basis is exactly
    symmetric (C^T == C, S^T == S) -- that symmetry is what lets the kernels
    use plain jnp.dot with no transposed contractions.
    """
    k = np.arange(period)
    kn_mod = (np.outer(k, k) % period).astype(np.float64)
    theta = 2.0 * np.pi * kn_mod / float(period)
    # TODO(synk): a bf16 basis (f32 accumulation) would halve the dominant CS
    # HBM stream and hit the fast MXU path on v6e/v7x, but must be
    # re-validated against the FFT reference at the largest intended P first.
    cs = np.concatenate([np.cos(theta), np.sin(theta)], axis=1)
    return jnp.asarray(cs.astype(np.float32))


def _pack_rhs(xr, xi):
    """(2P, 2) RHS so that CS @ rhs == [Xr | Xi] (forward DFT in one matmul)."""
    top = jnp.concatenate([xr, xi], axis=1)     # rows 0..P-1  : [xr,  xi]
    bot = jnp.concatenate([xi, -xr], axis=1)    # rows P..2P-1 : [xi, -xr]
    return jnp.concatenate([top, bot], axis=0)


def _clamp_vmem(nbytes):
    """Explicit scoped-VMEM limit: residency + margin, capped at v7x physical."""
    return int(min(max(int(nbytes), 4 * _MIB), 64 * _MIB))


def _largest_tile(period, cap):
    """Largest multiple of 128 that divides `period` and is <= cap."""
    start = max(128, (cap // 128) * 128)
    for t in range(start, 127, -128):
        if period % t == 0:
            return t
    return 128


# ---------------------------------------------------------------------------
# Single-block fused kernel (whole problem resident in VMEM) — small periods.
# ---------------------------------------------------------------------------
def _fused_circulant_kernel(xp_ref, cs_ref, o_ref, a_ref):
    """xp:(2P,2) packed vector, cs:(P,2P) [C|S], o:(P,P), a:(2P,P) scratch."""
    f32 = jnp.float32
    P = o_ref.shape[0]
    CS = cs_ref[...]                                              # (P, 2P)

    # Forward DFT in one MXU matmul: [Xr | Xi] = CS @ packed_rhs.
    X2 = jnp.dot(CS, xp_ref[...], preferred_element_type=f32)     # (P, 2)
    Xr = X2[:, 0:1]
    Xi = X2[:, 1:2]

    # Unit-magnitude normalization (exact f32 rsqrt; EUP slot, effectively free).
    inv_mag = lax.rsqrt(Xr * Xr + Xi * Xi)
    Yr = Xr * inv_mag
    Yi = Xi * inv_mag

    # Stage A = [Ar; Ai] in VMEM so the circulant is ONE K=2P matmul.
    C = CS[:, :P]
    S = CS[:, P:]
    a_ref[:P, :] = Yr * C + Yi * S                                # Ar
    a_ref[P:, :] = Yr * S - Yi * C                                # Ai

    # out = (1/P) * (C @ Ar + S @ Ai) = (1/P) * CS @ [Ar; Ai]   (C^T=C, S^T=S)
    o_ref[...] = jnp.dot(CS, a_ref[...], preferred_element_type=f32) * (1.0 / P)


def _periodic_fused(xpacked, cs):
    P = cs.shape[0]
    # Real residency: CS (8P^2) + A scratch (8P^2) + out (4P^2) + xp (16P).
    resident = 20 * P * P + 16 * P
    if resident > 48 * _MIB:
        # TODO(synk): zero-pad the basis/A up to a 128-multiple and route very
        # large non-128-multiple periods through the tiled path instead of
        # growing a single resident block past v7x's 64 MiB physical VMEM.
        raise ValueError(
            f"period={P} too large for the single-block fused path; use a "
            "128-multiple period so the tiled path can be taken")
    return pl.pallas_call(
        _fused_circulant_kernel,
        out_shape=jax.ShapeDtypeStruct((P, P), jnp.float32),
        # Grid-less call: whole arrays live in VMEM once; no pointless
        # double-buffering of the basis.
        in_specs=[
            pl.BlockSpec(memory_space=pltpu.MemorySpace.VMEM),
            pl.BlockSpec(memory_space=pltpu.MemorySpace.VMEM),
        ],
        out_specs=pl.BlockSpec(memory_space=pltpu.MemorySpace.VMEM),
        scratch_shapes=[pltpu.VMEM((2 * P, P), jnp.float32)],
        compiler_params=pltpu.CompilerParams(
            vmem_limit_bytes=_clamp_vmem(1.25 * resident + 2 * _MIB)),
    )(xpacked, cs)


# ---------------------------------------------------------------------------
# Tiled path for large 128-multiple periods.
# ---------------------------------------------------------------------------
def _spectrum_a_kernel(xp_ref, cs_ref, a_ref):
    """Row-tiled prologue, all fused: X = CS_rows @ xp; Y = X/|X|; A staging.

    xp:(2P,2) packed vector (resident), cs:(t,2P) basis row tile,
    a:(2, t, P) output tile with a[0]=Ar rows, a[1]=Ai rows.
    Y never leaves VMEM and the only HBM store is the lane-dense A tile.
    """
    P = a_ref.shape[2]
    cs = cs_ref[...]                                              # (t, 2P)
    X = jnp.dot(cs, xp_ref[...], preferred_element_type=jnp.float32)  # (t, 2)
    Xr = X[:, 0:1]
    Xi = X[:, 1:2]
    inv_mag = lax.rsqrt(Xr * Xr + Xi * Xi)
    Yr = Xr * inv_mag
    Yi = Xi * inv_mag
    C = cs[:, :P]
    S = cs[:, P:]
    a_ref[0] = Yr * C + Yi * S                                    # Ar rows
    a_ref[1] = Yr * S - Yi * C                                    # Ai rows


def _circulant_matmul_kernel(cs_ref, a_ref, o_ref, acc_ref, *, inv_p):
    """Canonical 2-operand matmul: acc[i,j] += CS[i, (h,k)] @ A[h, k, j]."""
    h = pl.program_id(2)
    k = pl.program_id(3)

    @pl.when((h == 0) & (k == 0))
    def _init():
        acc_ref[...] = jnp.zeros_like(acc_ref)

    acc_ref[...] += jnp.dot(cs_ref[...], a_ref[...],
                            preferred_element_type=jnp.float32)

    @pl.when((h == 1) & (k == pl.num_programs(3) - 1))
    def _finalize():
        o_ref[...] = acc_ref[...] * inv_p


def _periodic_tiled(xpacked, cs):
    P = cs.shape[0]
    assert P % 128 == 0, "tiled path requires a 128-multiple period"

    # ---- Stage 1: A = [Ar; Ai], fused DFT + normalize, row-tiled. ----------
    t_rows = _largest_tile(P, 256)
    n_rows = P // t_rows
    prologue_vmem = _clamp_vmem(1.5 * (32 * t_rows * P + 16 * P) + 2 * _MIB)
    a = pl.pallas_call(
        _spectrum_a_kernel,
        out_shape=jax.ShapeDtypeStruct((2, P, P), jnp.float32),
        grid=(n_rows,),
        in_specs=[
            # Packed vector: constant block index -> fetched once, resident.
            pl.BlockSpec((2 * P, 2), lambda r: (0, 0)),
            # Basis row tile (also carries the C/S rows needed to form A).
            pl.BlockSpec((t_rows, 2 * P), lambda r: (r, 0)),
        ],
        out_specs=pl.BlockSpec((2, t_rows, P), lambda r: (0, r, 0)),
        compiler_params=pltpu.CompilerParams(
            dimension_semantics=("parallel",),
            vmem_limit_bytes=prologue_vmem),
    )(xpacked, cs)

    # ---- Stage 2: out = (1/P) * CS @ [Ar; Ai], big-tile 2-operand matmul. --
    tm = _largest_tile(P, min(512, P // 2))   # >=2 row blocks -> both v7x TCs
    tn = _largest_tile(P, 512)                # lane-dense, large output tiles
    tk = _largest_tile(P, 256)
    kb = P // tk
    step_bytes = ((tm * tk + tk * tn) * 4 * 2   # double-buffered LHS/RHS tiles
                  + tm * tn * 4 * 3)            # f32 acc + double-buffered out
    stage2_vmem = _clamp_vmem(1.5 * step_bytes + 2 * _MIB)

    kernel = functools.partial(_circulant_matmul_kernel, inv_p=1.0 / P)
    return pl.pallas_call(
        kernel,
        out_shape=jax.ShapeDtypeStruct((P, P), jnp.float32),
        # Grid: (row blocks, col blocks, {Ar|Ai} half, K blocks within half).
        grid=(P // tm, P // tn, 2, kb),
        in_specs=[
            # CS columns 0..P-1 are C (h=0, Ar), P..2P-1 are S (h=1, Ai).
            pl.BlockSpec((tm, tk), lambda i, j, h, k: (i, h * kb + k)),
            # A stored as (2, P, P); leading dim squeezed out of the kernel.
            pl.BlockSpec((None, tk, tn), lambda i, j, h, k: (h, k, j)),
        ],
        out_specs=pl.BlockSpec((tm, tn), lambda i, j, h, k: (i, j)),
        scratch_shapes=[pltpu.VMEM((tm, tn), jnp.float32)],
        compiler_params=pltpu.CompilerParams(
            dimension_semantics=("parallel", "parallel",
                                 "arbitrary", "arbitrary"),
            vmem_limit_bytes=stage2_vmem),
    )(cs, a)


# ---------------------------------------------------------------------------
# Module forward.
# ---------------------------------------------------------------------------
def cyclic_vector_generator_d(period: int, mode: str, key, *, force_path=None):
    """Forward pass of CyclicVectorGeneratorD. force_path in {None,'fused','tiled'}."""
    if mode != "periodic":
        # Non-periodic branch is just randn(period, period): pure RNG glue.
        return jax.random.normal(key, (period, period), jnp.float32)

    k1, k2 = jax.random.split(key)
    # torch.randn(period, complex64): real/imag parts are iid Gaussian; any
    # nonzero scale cancels after the |X| normalization.
    xr = jax.random.normal(k1, (period, 1), jnp.float32)
    xi = jax.random.normal(k2, (period, 1), jnp.float32)

    cs = _fused_dft_basis(period)
    xp = _pack_rhs(xr, xi)

    use_tiled = (period % 128 == 0) and (period > 512)
    if force_path == "fused":
        use_tiled = False
    elif force_path == "tiled" and period % 128 == 0:
        use_tiled = True

    if use_tiled:
        return _periodic_tiled(xp, cs)
    return _periodic_fused(xp, cs)


# ---------------------------------------------------------------------------
# Pure-JAX reference mirroring the PyTorch FFT path exactly.
# ---------------------------------------------------------------------------
def _reference_periodic(xr, xi):
    P = xr.shape[0]
    x = xr[:, 0] + 1j * xi[:, 0]
    X = jnp.fft.fft(x)
    Y = X / jnp.abs(X)
    c = jnp.fft.ifft(Y).real
    idx = (jnp.arange(P)[:, None] - jnp.arange(P)[None, :]) % P
    return c[idx].astype(jnp.float32)     # out[j, i] = c[(j - i) mod P]


if __name__ == "__main__":
    key = jax.random.PRNGKey(0)

    # --- periodic mode, single-block fused kernel (P = 128) ---
    P = 128
    out = jax.block_until_ready(cyclic_vector_generator_d(P, "periodic", key))
    k1, k2 = jax.random.split(key)
    xr = jax.random.normal(k1, (P, 1), jnp.float32)
    xi = jax.random.normal(k2, (P, 1), jnp.float32)
    ref = jax.block_until_ready(_reference_periodic(xr, xi))
    assert out.shape == (P, P) and out.dtype == jnp.float32
    assert float(jnp.max(jnp.abs(out - ref))) < 1e-3, "fused path mismatch"

    # --- periodic mode, tiled kernels (P = 512, forced) ---
    P2 = 512
    out2 = jax.block_until_ready(
        cyclic_vector_generator_d(P2, "periodic", key, force_path="tiled"))
    k1b, k2b = jax.random.split(key)
    xr2 = jax.random.normal(k1b, (P2, 1), jnp.float32)
    xi2 = jax.random.normal(k2b, (P2, 1), jnp.float32)
    ref2 = jax.block_until_ready(_reference_periodic(xr2, xi2))
    assert out2.shape == (P2, P2) and out2.dtype == jnp.float32
    assert float(jnp.max(jnp.abs(out2 - ref2))) < 1e-3, "tiled path mismatch"

    # --- non-periodic mode (plain randn) ---
    out_np = jax.block_until_ready(
        cyclic_vector_generator_d(P, "nonperiodic", key))
    assert out_np.shape == (P, P)

    print("KERNEL_OK")
</pallas_src>

<mosaic_0001>
module attributes {stable_mosaic.version = 11 : i64} {
  func.func @_fused_circulant_kernel(%arg0: memref<256x2xf32, #tpu.memory_space<vmem>>, %arg1: memref<128x256xf32, #tpu.memory_space<vmem>>, %arg2: memref<128x128xf32, #tpu.memory_space<vmem>>, %arg3: memref<256x128xf32, #tpu.memory_space<vmem>>) attributes {dimension_semantics = [], scalar_prefetch = 0 : i64, scratch_operands = 1 : i64, tpu.core_type = #tpu.core_type<tc>} {
    %c0 = arith.constant 0 : index
    %c0_0 = arith.constant 0 : index
    %0 = vector.load %arg1[%c0, %c0_0] : memref<128x256xf32, #tpu.memory_space<vmem>>, vector<128x256xf32>
    %c0_1 = arith.constant 0 : index
    %c0_2 = arith.constant 0 : index
    %1 = vector.load %arg0[%c0_1, %c0_2] : memref<256x2xf32, #tpu.memory_space<vmem>>, vector<256x2xf32>
    %cst = arith.constant dense<0.000000e+00> : vector<128x2xf32>
    %2 = tpu.matmul %0, %1, %cst {dimension_numbers = #tpu.dot_dimension_numbers<[1], [0], [0], [1], [0, 0, 1, 1], [], []>} : vector<128x256xf32>, vector<256x2xf32>, vector<128x2xf32> -> vector<128x2xf32>
    %3 = vector.extract_strided_slice %2 {offsets = [0, 0], sizes = [128, 1], strides = [1, 1]} : vector<128x2xf32> to vector<128x1xf32>
    %4 = vector.extract_strided_slice %2 {offsets = [0, 1], sizes = [128, 1], strides = [1, 1]} : vector<128x2xf32> to vector<128x1xf32>
    %5 = arith.mulf %3, %3 : vector<128x1xf32>
    %6 = arith.mulf %4, %4 : vector<128x1xf32>
    %7 = arith.addf %5, %6 : vector<128x1xf32>
    %8 = math.rsqrt %7 : vector<128x1xf32>
    %9 = arith.mulf %3, %8 : vector<128x1xf32>
    %10 = arith.mulf %4, %8 : vector<128x1xf32>
    %11 = vector.extract_strided_slice %0 {offsets = [0, 0], sizes = [128, 128], strides = [1, 1]} : vector<128x256xf32> to vector<128x128xf32>
    %12 = vector.extract_strided_slice %0 {offsets = [0, 128], sizes = [128, 128], strides = [1, 1]} : vector<128x256xf32> to vector<128x128xf32>
    %13 = vector.broadcast %9 : vector<128x1xf32> to vector<128x128xf32>
    %14 = arith.mulf %13, %11 : vector<128x128xf32>
    %15 = vector.broadcast %10 : vector<128x1xf32> to vector<128x128xf32>
    %16 = arith.mulf %15, %12 : vector<128x128xf32>
    %17 = arith.addf %14, %16 : vector<128x128xf32>
    %c0_3 = arith.constant 0 : index
    %c0_4 = arith.constant 0 : index
    %18 = vector.load %arg3[%c0_3, %c0_4] : memref<256x128xf32, #tpu.memory_space<vmem>>, vector<128x128xf32>
    tpu.vector_store %arg3[%c0_3, %c0_4], %17 {strides = array<i32>} : memref<256x128xf32, #tpu.memory_space<vmem>>, vector<128x128xf32>,
    %19 = vector.broadcast %9 : vector<128x1xf32> to vector<128x128xf32>
    %20 = arith.mulf %19, %12 : vector<128x128xf32>
    %21 = vector.broadcast %10 : vector<128x1xf32> to vector<128x128xf32>
    %22 = arith.mulf %21, %11 : vector<128x128xf32>
    %23 = arith.subf %20, %22 : vector<128x128xf32>
    %c128 = arith.constant 128 : index
    %c0_5 = arith.constant 0 : index
    %24 = vector.load %arg3[%c128, %c0_5] : memref<256x128xf32, #tpu.memory_space<vmem>>, vector<128x128xf32>
    tpu.vector_store %arg3[%c128, %c0_5], %23 {strides = array<i32>} : memref<256x128xf32, #tpu.memory_space<vmem>>, vector<128x128xf32>,
    %c0_6 = arith.constant 0 : index
    %c0_7 = arith.constant 0 : index
    %25 = vector.load %arg3[%c0_6, %c0_7] : memref<256x128xf32, #tpu.memory_space<vmem>>, vector<256x128xf32>
    %cst_8 = arith.constant dense<0.000000e+00> : vector<128x128xf32>
    %26 = tpu.matmul %0, %25, %cst_8 {dimension_numbers = #tpu.dot_dimension_numbers<[1], [0], [0], [1], [0, 0, 1, 1], [], []>} : vector<128x256xf32>, vector<256x128xf32>, vector<128x128xf32> -> vector<128x128xf32>
    %cst_9 = arith.constant 7.812500e-03 : f32
    %27 = vector.broadcast %cst_9 : f32 to vector<128x128xf32>
    %28 = arith.mulf %26, %27 : vector<128x128xf32>
    %c0_10 = arith.constant 0 : index
    %c0_11 = arith.constant 0 : index
    %29 = vector.load %arg2[%c0_10, %c0_11] : memref<128x128xf32, #tpu.memory_space<vmem>>, vector<128x128xf32>
    tpu.vector_store %arg2[%c0_10, %c0_11], %28 {strides = array<i32>} : memref<128x128xf32, #tpu.memory_space<vmem>>, vector<128x128xf32>,
    return
  }
}

</mosaic_0001>

<llo_original>
// kernel: tpu_custom_call.1
$region0: #{tpu_custom_call.1}
  #allocation0 [shape = 'u32[]', space=smem, size = 0x4, offset = 0x4, fixed_abs, tag = 'smem constant byte address 0x4 - core index']
  #allocation1 [shape = 'u32[144,128]{1,0:T(1,128)}', space=vmem, size = 0x12000, scoped, tag = 'internal scratch']
  #allocation2 [shape = 'f32[256,128]{1,0:T(8,128)}', space=vmem, size = 0x20000, scoped, tag = 'scratch operand']
  %s0 = inlined_call_operand.vmem [shape: f32[256,2], index: 0, kind: input, shape index: {}]
  %s1 = inlined_call_operand.vmem [shape: f32[128,256], index: 1, kind: input, shape index: {}]
  %s2 = inlined_call_operand.hbm [shape: f32[128,128], index: 2, kind: output, shape index: {}]
  %s3 = sld [smem:[#allocation0]]
  $region18: #{tpu_custom_call.1} parent=0
    _
  %s5 = ssub.s32 1, %s3
  %s6 = scalar_select 0, %s5, %s3
  $region1: #{tpu_custom_call.1} parent=0
    #allocation3 [shape = 'u8[65536]{0}', space=vmem, size = 0x10000, scoped, tag = 'output window, operand 0, single buffered']
    #allocation4 [shape = 's32[1]{0}', space=sflag, size = 0x4, scoped, tag = 'scoped memory for tpu_custom_call.1']
    %7 = vsyncpa [#allocation4], 0
    // Predicated region
    $region2: #{tpu_custom_call.1} parent=1 // pred_check
      _
    $region3: #{tpu_custom_call.1} parent=1 // pred_check_branch
      %9 = sbr.rel (0) target = $region5
    $region4: #{tpu_custom_call.1} parent=1 // pred_region
      _
    $region5: #{tpu_custom_call.1} parent=1 // pred_fallthru
      _
    // Predicated region
    $region6: #{tpu_custom_call.1} parent=1 // pred_check
      _
    $region7: #{tpu_custom_call.1} parent=1 // pred_check_branch
      %11 = sbr.rel (0) target = $region9
    $region8: #{tpu_custom_call.1} parent=1 // pred_region
      _
    $region9: #{tpu_custom_call.1} parent=1 // pred_fallthru
      _
    %v12 = vld [vmem:[%s1] sm:$0xff]
    %v13 = vld [vmem:[%s1 + $0x8] sm:$0xff]
    %v14 = vld [vmem:[%s1 + $0x10] sm:$0xff]
    %v15 = vld [vmem:[%s1 + $0x18] sm:$0xff]
    %v16 = vld [vmem:[%s1 + $0x20] sm:$0xff]
    %v17 = vld [vmem:[%s1 + $0x28] sm:$0xff]
    %v18 = vld [vmem:[%s1 + $0x30] sm:$0xff]
    %v19 = vld [vmem:[%s1 + $0x38] sm:$0xff]
    %v20 = vld [vmem:[%s1 + $0x40] sm:$0xff]
    %v21 = vld [vmem:[%s1 + $0x48] sm:$0xff]
    %v22 = vld [vmem:[%s1 + $0x50] sm:$0xff]
    %v23 = vld [vmem:[%s1 + $0x58] sm:$0xff]
    %v24 = vld [vmem:[%s1 + $0x60] sm:$0xff]
    %v25 = vld [vmem:[%s1 + $0x68] sm:$0xff]
    %v26 = vld [vmem:[%s1 + $0x70] sm:$0xff]
    %v27 = vld [vmem:[%s1 + $0x78] sm:$0xff]
    %v28 = vld [vmem:[%s1 + $0x80] sm:$0xff]
    %v29 = vld [vmem:[%s1 + $0x88] sm:$0xff]
    %v30 = vld [vmem:[%s1 + $0x90] sm:$0xff]
    %v31 = vld [vmem:[%s1 + $0x98] sm:$0xff]
    %v32 = vld [vmem:[%s1 + $0xa0] sm:$0xff]
    %v33 = vld [vmem:[%s1 + $0xa8] sm:$0xff]
    %v34 = vld [vmem:[%s1 + $0xb0] sm:$0xff]
    %v35 = vld [vmem:[%s1 + $0xb8] sm:$0xff]
    %v36 = vld [vmem:[%s1 + $0xc0] sm:$0xff]
    %v37 = vld [vmem:[%s1 + $0xc8] sm:$0xff]
    %v38 = vld [vmem:[%s1 + $0xd0] sm:$0xff]
    %v39 = vld [vmem:[%s1 + $0xd8] sm:$0xff]
    %v40 = vld [vmem:[%s1 + $0xe0] sm:$0xff]
    %v41 = vld [vmem:[%s1 + $0xe8] sm:$0xff]
    %v42 = vld [vmem:[%s1 + $0xf0] sm:$0xff]
    %v43 = vld [vmem:[%s1 + $0xf8] sm:$0xff]
    %v44 = vld [vmem:[%s0] sm:$0xff]
    %v45 = vld [vmem:[%s0 + $0x8] sm:$0xff]
    %v46 = vld [vmem:[%s0 + $0x10] sm:$0xff]
    %v47 = vld [vmem:[%s0 + $0x18] sm:$0xff]
    %v48 = vld [vmem:[%s0 + $0x20] sm:$0xff]
    %v49 = vld [vmem:[%s0 + $0x28] sm:$0xff]
    %v50 = vld [vmem:[%s0 + $0x30] sm:$0xff]
    %v51 = vld [vmem:[%s0 + $0x38] sm:$0xff]
    %v52 = vld [vmem:[%s0 + $0x40] sm:$0xff]
    %v53 = vld [vmem:[%s0 + $0x48] sm:$0xff]
    %v54 = vld [vmem:[%s0 + $0x50] sm:$0xff]
    %v55 = vld [vmem:[%s0 + $0x58] sm:$0xff]
    %v56 = vld [vmem:[%s0 + $0x60] sm:$0xff]
    %v57 = vld [vmem:[%s0 + $0x68] sm:$0xff]
    %v58 = vld [vmem:[%s0 + $0x70] sm:$0xff]
    %v59 = vld [vmem:[%s0 + $0x78] sm:$0xff]
    %v60 = vld [vmem:[%s0 + $0x80] sm:$0xff]
    %v61 = vld [vmem:[%s0 + $0x88] sm:$0xff]
    %v62 = vld [vmem:[%s0 + $0x90] sm:$0xff]
    %v63 = vld [vmem:[%s0 + $0x98] sm:$0xff]
    %v64 = vld [vmem:[%s0 + $0xa0] sm:$0xff]
    %v65 = vld [vmem:[%s0 + $0xa8] sm:$0xff]
    %v66 = vld [vmem:[%s0 + $0xb0] sm:$0xff]
    %v67 = vld [vmem:[%s0 + $0xb8] sm:$0xff]
    %v68 = vld [vmem:[%s0 + $0xc0] sm:$0xff]
    %v69 = vld [vmem:[%s0 + $0xc8] sm:$0xff]
    %v70 = vld [vmem:[%s0 + $0xd0] sm:$0xff]
    %v71 = vld [vmem:[%s0 + $0xd8] sm:$0xff]
    %v72 = vld [vmem:[%s0 + $0xe0] sm:$0xff]
    %v73 = vld [vmem:[%s0 + $0xe8] sm:$0xff]
    %v74 = vld [vmem:[%s0 + $0xf0] sm:$0xff]
    %v75 = vld [vmem:[%s0 + $0xf8] sm:$0xff]
    %76 = vmatprep.subr.mxu0 0.0
    %77 = vmatpush1.msra.mxu0 %v59
    %78 = vmatprep.subr.mxu0 0.0
    %79 = vmatpush1.msra.mxu0 %v58
    %80 = vmatprep.subr.mxu0 0.0
    %81 = vmatpush1.msra.mxu0 %v57
    %82 = vmatprep.subr.mxu0 0.0
    %83 = vmatpush1.msra.mxu0 %v56
    %84 = vmatprep.subr.mxu0 0.0
    %85 = vmatpush1.msra.mxu0 %v55
    %86 = vmatprep.subr.mxu0 0.0
    %87 = vmatpush1.msra.mxu0 %v54
    %88 = vmatprep.subr.mxu0 0.0
    %89 = vmatpush1.msra.mxu0 %v53
    %90 = vmatprep.subr.mxu0 0.0
    %91 = vmatpush1.msra.mxu0 %v52
    %92 = vmatprep.subr.mxu0 0.0
    %93 = vmatpush1.msra.mxu0 %v51
    %94 = vmatprep.subr.mxu0 0.0
    %95 = vmatpush1.msra.mxu0 %v50
    %96 = vmatprep.subr.mxu0 0.0
    %97 = vmatpush1.msra.mxu0 %v49
    %98 = vmatprep.subr.mxu0 0.0
    %99 = vmatpush1.msra.mxu0 %v48
    %100 = vmatprep.subr.mxu0 0.0
    %101 = vmatpush1.msra.mxu0 %v47
    %102 = vmatprep.subr.mxu0 0.0
    %103 = vmatpush1.msra.mxu0 %v46
    %104 = vmatprep.subr.mxu0 0.0
    %105 = vmatpush1.msra.mxu0 %v45
    %106 = vmatprep.subr.mxu0 0.0
    %107 = vmatpush1.msra.mxu0 %v44
    %108 = vmatprep.subr.mxu0 0.0
    %109 = vmatpush2.msra.mxu0 %v75
    %110 = vmatprep.subr.mxu0 0.0
    %111 = vmatpush2.msra.mxu0 %v74
    %112 = vmatprep.subr.mxu0 0.0
    %113 = vmatpush2.msra.mxu0 %v73
    %114 = vmatprep.subr.mxu0 0.0
    %115 = vmatpush2.msra.mxu0 %v72
    %116 = vmatprep.subr.mxu0 0.0
    %117 = vmatpush2.msra.mxu0 %v71
    %118 = vmatprep.subr.mxu0 0.0
    %119 = vmatpush2.msra.mxu0 %v70
    %120 = vmatprep.subr.mxu0 0.0
    %121 = vmatpush2.msra.mxu0 %v69
    %122 = vmatprep.subr.mxu0 0.0
    %123 = vmatpush2.msra.mxu0 %v68
    %124 = vmatprep.subr.mxu0 0.0
    %125 = vmatpush2.msra.mxu0 %v67
    %126 = vmatprep.subr.mxu0 0.0
    %127 = vmatpush2.msra.mxu0 %v66
    %128 = vmatprep.subr.mxu0 0.0
    %129 = vmatpush2.msra.mxu0 %v65
    %130 = vmatprep.subr.mxu0 0.0
    %131 = vmatpush2.msra.mxu0 %v64
    %132 = vmatprep.subr.mxu0 0.0
    %133 = vmatpush2.msra.mxu0 %v63
    %134 = vmatprep.subr.mxu0 0.0
    %135 = vmatpush2.msra.mxu0 %v62
    %136 = vmatprep.subr.mxu0 0.0
    %137 = vmatpush2.msra.mxu0 %v61
    %138 = vmatprep.subr.mxu0 0.0
    %139 = vmatpush2.msra.mxu0 %v60
    %140 = vmatprep.mubr.f32.mxu0 %v13
    %141 = vmatmul.mubr.f32.gmra.mxu0 %v12
    %v142 = vpop.f32.mrf.mxu0
    %v143 = vadd.f32 0.0, %v142
    %v144 = vpop.f32.mrf.mxu0
    %145 = vmatprep.mubr.f32.mxu0 %v15
    %146 = vmatmul.mubr.f32.gmra.mxu0 %v14
    %v147 = vpop.f32.mrf.mxu0
    %v148 = vadd.f32 0.0, %v147
    %v149 = vpop.f32.mrf.mxu0
    %150 = vmatprep.mubr.f32.mxu0 %v17
    %151 = vmatmul.mubr.f32.gmra.mxu0 %v16
    %v152 = vpop.f32.mrf.mxu0
    %v153 = vadd.f32 0.0, %v152
    %v154 = vpop.f32.mrf.mxu0
    %155 = vmatprep.mubr.f32.mxu0 %v19
    %156 = vmatmul.mubr.f32.gmra.mxu0 %v18
    %v157 = vpop.f32.mrf.mxu0
    %v158 = vadd.f32 0.0, %v157
    %v159 = vpop.f32.mrf.mxu0
    %160 = vmatprep.mubr.f32.mxu0 %v21
    %161 = vmatmul.mubr.f32.gmra.mxu0 %v20
    %v162 = vpop.f32.mrf.mxu0
    %v163 = vadd.f32 0.0, %v162
    %v164 = vpop.f32.mrf.mxu0
    %165 = vmatprep.mubr.f32.mxu0 %v23
    %166 = vmatmul.mubr.f32.gmra.mxu0 %v22
    %v167 = vpop.f32.mrf.mxu0
    %v168 = vadd.f32 0.0, %v167
    %v169 = vpop.f32.mrf.mxu0
    %170 = vmatprep.mubr.f32.mxu0 %v25
    %171 = vmatmul.mubr.f32.gmra.mxu0 %v24
    %v172 = vpop.f32.mrf.mxu0
    %v173 = vadd.f32 0.0, %v172
    %v174 = vpop.f32.mrf.mxu0
    %175 = vmatprep.mubr.f32.mxu0 %v27
    %176 = vmatmul.mubr.f32.gmra.mxu0 %v26
    %v177 = vpop.f32.mrf.mxu0
    %v178 = vadd.f32 0.0, %v177
    %v179 = vpop.f32.mrf.mxu0
    %180 = vmatprep.mubr.f32.mxu0 %v29
    %181 = vmatmul.mubr.f32.gmra.mxu0 %v28
    %v182 = vpop.f32.mrf.mxu0
    %v183 = vadd.f32 0.0, %v182
    %v184 = vpop.f32.mrf.mxu0
    %185 = vmatprep.mubr.f32.mxu0 %v31
    %186 = vmatmul.mubr.f32.gmra.mxu0 %v30
    %v187 = vpop.f32.mrf.mxu0
    %v188 = vadd.f32 0.0, %v187
    %v189 = vpop.f32.mrf.mxu0
    %190 = vmatprep.mubr.f32.mxu0 %v33
    %191 = vmatmul.mubr.f32.gmra.mxu0 %v32
    %v192 = vpop.f32.mrf.mxu0
    %v193 = vadd.f32 0.0, %v192
    %v194 = vpop.f32.mrf.mxu0
    %195 = vmatprep.mubr.f32.mxu0 %v35
    %196 = vmatmul.mubr.f32.gmra.mxu0 %v34
    %v197 = vpop.f32.mrf.mxu0
    %v198 = vadd.f32 0.0, %v197
    %v199 = vpop.f32.mrf.mxu0
    %200 = vmatprep.mubr.f32.mxu0 %v37
    %201 = vmatmul.mubr.f32.gmra.mxu0 %v36
    %v202 = vpop.f32.mrf.mxu0
    %v203 = vadd.f32 0.0, %v202
    %v204 = vpop.f32.mrf.mxu0
    %205 = vmatprep.mubr.f32.mxu0 %v39
    %206 = vmatmul.mubr.f32.gmra.mxu0 %v38
    %v207 = vpop.f32.mrf.mxu0
    %v208 = vadd.f32 0.0, %v207
    %v209 = vpop.f32.mrf.mxu0
    %210 = vmatprep.mubr.f32.mxu0 %v41
    %211 = vmatmul.mubr.f32.gmra.mxu0 %v40
    %v212 = vpop.f32.mrf.mxu0
    %v213 = vadd.f32 0.0, %v212
    %v214 = vpop.f32.mrf.mxu0
    %215 = vmatprep.mubr.f32.mxu0 %v43
    %216 = vmatmul.mubr.f32.gmra.mxu0 %v42
    %v217 = vpop.f32.mrf.mxu0
    %v218 = vadd.f32 0.0, %v217
    %v219 = vpop.f32.mrf.mxu0
    %220 = vdwg.mxu0
    %v221 = vmul.f32 %v143, %v143
    %v222 = vmul.f32 %v148, %v148
    %v223 = vmul.f32 %v153, %v153
    %v224 = vmul.f32 %v158, %v158
    %v225 = vmul.f32 %v163, %v163
    %v226 = vmul.f32 %v168, %v168
    %v227 = vmul.f32 %v173, %v173
    %v228 = vmul.f32 %v178, %v178
    %v229 = vmul.f32 %v183, %v183
    %v230 = vmul.f32 %v188, %v188
    %v231 = vmul.f32 %v193, %v193
    %v232 = vmul.f32 %v198, %v198
    %v233 = vmul.f32 %v203, %v203
    %v234 = vmul.f32 %v208, %v208
    %v235 = vmul.f32 %v213, %v213
    %v236 = vmul.f32 %v218, %v218
    %253 = vrot.lane.b32.xlu0 %v221, 127
    %v254 = vpop.permute.xlu0 %253
    %255 = vrot.lane.b32.xlu0 %v222, 127
    %v256 = vpop.permute.xlu0 %255
    %257 = vrot.lane.b32.xlu0 %v223, 127
    %v258 = vpop.permute.xlu0 %257
    %259 = vrot.lane.b32.xlu0 %v224, 127
    %v260 = vpop.permute.xlu0 %259
    %261 = vrot.lane.b32.xlu0 %v225, 127
    %v262 = vpop.permute.xlu0 %261
    %263 = vrot.lane.b32.xlu0 %v226, 127
    %v264 = vpop.permute.xlu0 %263
    %265 = vrot.lane.b32.xlu0 %v227, 127
    %v266 = vpop.permute.xlu0 %265
    %267 = vrot.lane.b32.xlu0 %v228, 127
    %v268 = vpop.permute.xlu0 %267
    %269 = vrot.lane.b32.xlu0 %v229, 127
    %v270 = vpop.permute.xlu0 %269
    %271 = vrot.lane.b32.xlu0 %v230, 127
    %v272 = vpop.permute.xlu0 %271
    %273 = vrot.lane.b32.xlu0 %v231, 127
    %v274 = vpop.permute.xlu0 %273
    %275 = vrot.lane.b32.xlu0 %v232, 127
    %v276 = vpop.permute.xlu0 %275
    %277 = vrot.lane.b32.xlu0 %v233, 127
    %v278 = vpop.permute.xlu0 %277
    %279 = vrot.lane.b32.xlu0 %v234, 127
    %v280 = vpop.permute.xlu0 %279
    %281 = vrot.lane.b32.xlu0 %v235, 127
    %v282 = vpop.permute.xlu0 %281
    %283 = vrot.lane.b32.xlu0 %v236, 127
    %v284 = vpop.permute.xlu0 %283
    %v301 = vadd.f32 %v221, %v254
    %v302 = vadd.f32 %v222, %v256
    %v303 = vadd.f32 %v223, %v258
    %v304 = vadd.f32 %v224, %v260
    %v305 = vadd.f32 %v225, %v262
    %v306 = vadd.f32 %v226, %v264
    %v307 = vadd.f32 %v227, %v266
    %v308 = vadd.f32 %v228, %v268
    %v309 = vadd.f32 %v229, %v270
    %v310 = vadd.f32 %v230, %v272
    %v311 = vadd.f32 %v231, %v274
    %v312 = vadd.f32 %v232, %v276
    %v313 = vadd.f32 %v233, %v278
    %v314 = vadd.f32 %v234, %v280
    %v315 = vadd.f32 %v235, %v282
    %v316 = vadd.f32 %v236, %v284
    %v317 = vrsqrt.pop %v301
    %v318 = vrsqrt.pop %v302
    %v319 = vrsqrt.pop %v303
    %v320 = vrsqrt.pop %v304
    %v321 = vrsqrt.pop %v305
    %v322 = vrsqrt.pop %v306
    %v323 = vrsqrt.pop %v307
    %v324 = vrsqrt.pop %v308
    %v325 = vrsqrt.pop %v309
    %v326 = vrsqrt.pop %v310
    %v327 = vrsqrt.pop %v311
    %v328 = vrsqrt.pop %v312
    %v329 = vrsqrt.pop %v313
    %v330 = vrsqrt.pop %v314
    %v331 = vrsqrt.pop %v315
    %v332 = vrsqrt.pop %v316
    %v333 = vmul.f32 %v143, %v317
    %v334 = vmul.f32 %v148, %v318
    %v335 = vmul.f32 %v153, %v319
    %v336 = vmul.f32 %v158, %v320
    %v337 = vmul.f32 %v163, %v321
    %v338 = vmul.f32 %v168, %v322
    %v339 = vmul.f32 %v173, %v323
    %v340 = vmul.f32 %v178, %v324
    %v341 = vmul.f32 %v183, %v325
    %v342 = vmul.f32 %v188, %v326
    %v343 = vmul.f32 %v193, %v327
    %v344 = vmul.f32 %v198, %v328
    %v345 = vmul.f32 %v203, %v329
    %v346 = vmul.f32 %v208, %v330
    %v347 = vmul.f32 %v213, %v331
    %v348 = vmul.f32 %v218, %v332
    %365 = vrot.lane.b32.xlu0 %v317, 1
    %v366 = vpop.permute.xlu0 %365
    %367 = vrot.lane.b32.xlu0 %v318, 1
    %v368 = vpop.permute.xlu0 %367
    %369 = vrot.lane.b32.xlu0 %v319, 1
    %v370 = vpop.permute.xlu0 %369
    %371 = vrot.lane.b32.xlu0 %v320, 1
    %v372 = vpop.permute.xlu0 %371
    %373 = vrot.lane.b32.xlu0 %v321, 1
    %v374 = vpop.permute.xlu0 %373
    %375 = vrot.lane.b32.xlu0 %v322, 1
    %v376 = vpop.permute.xlu0 %375
    %377 = vrot.lane.b32.xlu0 %v323, 1
    %v378 = vpop.permute.xlu0 %377
    %379 = vrot.lane.b32.xlu0 %v324, 1
    %v380 = vpop.permute.xlu0 %379
    %381 = vrot.lane.b32.xlu0 %v325, 1
    %v382 = vpop.permute.xlu0 %381
    %383 = vrot.lane.b32.xlu0 %v326, 1
    %v384 = vpop.permute.xlu0 %383
    %385 = vrot.lane.b32.xlu0 %v327, 1
    %v386 = vpop.permute.xlu0 %385
    %387 = vrot.lane.b32.xlu0 %v328, 1
    %v388 = vpop.permute.xlu0 %387
    %389 = vrot.lane.b32.xlu0 %v329, 1
    %v390 = vpop.permute.xlu0 %389
    %391 = vrot.lane.b32.xlu0 %v330, 1
    %v392 = vpop.permute.xlu0 %391
    %393 = vrot.lane.b32.xlu0 %v331, 1
    %v394 = vpop.permute.xlu0 %393
    %395 = vrot.lane.b32.xlu0 %v332, 1
    %v396 = vpop.permute.xlu0 %395
    %v413 = vmul.f32 %v143, %v366
    %v414 = vmul.f32 %v148, %v368
    %v415 = vmul.f32 %v153, %v370
    %v416 = vmul.f32 %v158, %v372
    %v417 = vmul.f32 %v163, %v374
    %v418 = vmul.f32 %v168, %v376
    %v419 = vmul.f32 %v173, %v378
    %v420 = vmul.f32 %v178, %v380
    %v421 = vmul.f32 %v183, %v382
    %v422 = vmul.f32 %v188, %v384
    %v423 = vmul.f32 %v193, %v386
    %v424 = vmul.f32 %v198, %v388
    %v425 = vmul.f32 %v203, %v390
    %v426 = vmul.f32 %v208, %v392
    %v427 = vmul.f32 %v213, %v394
    %v428 = vmul.f32 %v218, %v396
    %430 = vset.pattern.permute.xlu0 0
    %431 = vperm.xlu0 %430, %v333
    %v432 = vpop.permute.xlu0 %431
    %435 = vset.pattern.permute.xlu0 0
    %436 = vperm.xlu0 %435, %v334
    %v437 = vpop.permute.xlu0 %436
    %440 = vset.pattern.permute.xlu0 0
    %441 = vperm.xlu0 %440, %v335
    %v442 = vpop.permute.xlu0 %441
    %445 = vset.pattern.permute.xlu0 0
    %446 = vperm.xlu0 %445, %v336
    %v447 = vpop.permute.xlu0 %446
    %450 = vset.pattern.permute.xlu0 0
    %451 = vperm.xlu0 %450, %v337
    %v452 = vpop.permute.xlu0 %451
    %455 = vset.pattern.permute.xlu0 0
    %456 = vperm.xlu0 %455, %v338
    %v457 = vpop.permute.xlu0 %456
    %460 = vset.pattern.permute.xlu0 0
    %461 = vperm.xlu0 %460, %v339
    %v462 = vpop.permute.xlu0 %461
    %465 = vset.pattern.permute.xlu0 0
    %466 = vperm.xlu0 %465, %v340
    %v467 = vpop.permute.xlu0 %466
    %470 = vset.pattern.permute.xlu0 0
    %471 = vperm.xlu0 %470, %v341
    %v472 = vpop.permute.xlu0 %471
    %475 = vset.pattern.permute.xlu0 0
    %476 = vperm.xlu0 %475, %v342
    %v477 = vpop.permute.xlu0 %476
    %480 = vset.pattern.permute.xlu0 0
    %481 = vperm.xlu0 %480, %v343
    %v482 = vpop.permute.xlu0 %481
    %485 = vset.pattern.permute.xlu0 0
    %486 = vperm.xlu0 %485, %v344
    %v487 = vpop.permute.xlu0 %486
    %490 = vset.pattern.permute.xlu0 0
    %491 = vperm.xlu0 %490, %v345
    %v492 = vpop.permute.xlu0 %491
    %495 = vset.pattern.permute.xlu0 0
    %496 = vperm.xlu0 %495, %v346
    %v497 = vpop.permute.xlu0 %496
    %500 = vset.pattern.permute.xlu0 0
    %501 = vperm.xlu0 %500, %v347
    %v502 = vpop.permute.xlu0 %501
    %505 = vset.pattern.permute.xlu0 0
    %506 = vperm.xlu0 %505, %v348
    %v507 = vpop.permute.xlu0 %506
    %v509 = vmul.f32 %v432, %v12
    %v510 = vmul.f32 %v437, %v14
    %v511 = vmul.f32 %v442, %v16
    %v512 = vmul.f32 %v447, %v18
    %v513 = vmul.f32 %v452, %v20
    %v514 = vmul.f32 %v457, %v22
    %v515 = vmul.f32 %v462, %v24
    %v516 = vmul.f32 %v467, %v26
    %v517 = vmul.f32 %v472, %v28
    %v518 = vmul.f32 %v477, %v30
    %v519 = vmul.f32 %v482, %v32
    %v520 = vmul.f32 %v487, %v34
    %v521 = vmul.f32 %v492, %v36
    %v522 = vmul.f32 %v497, %v38
    %v523 = vmul.f32 %v502, %v40
    %v524 = vmul.f32 %v507, %v42
    %526 = vset.pattern.permute.xlu0 1
    %527 = vperm.xlu0 %526, %v413
    %v528 = vpop.permute.xlu0 %527
    %531 = vset.pattern.permute.xlu0 1
    %532 = vperm.xlu0 %531, %v414
    %v533 = vpop.permute.xlu0 %532
    %536 = vset.pattern.permute.xlu0 1
    %537 = vperm.xlu0 %536, %v415
    %v538 = vpop.permute.xlu0 %537
    %541 = vset.pattern.permute.xlu0 1
    %542 = vperm.xlu0 %541, %v416
    %v543 = vpop.permute.xlu0 %542
    %546 = vset.pattern.permute.xlu0 1
    %547 = vperm.xlu0 %546, %v417
    %v548 = vpop.permute.xlu0 %547
    %551 = vset.pattern.permute.xlu0 1
    %552 = vperm.xlu0 %551, %v418
    %v553 = vpop.permute.xlu0 %552
    %556 = vset.pattern.permute.xlu0 1
    %557 = vperm.xlu0 %556, %v419
    %v558 = vpop.permute.xlu0 %557
    %561 = vset.pattern.permute.xlu0 1
    %562 = vperm.xlu0 %561, %v420
    %v563 = vpop.permute.xlu0 %562
    %566 = vset.pattern.permute.xlu0 1
    %567 = vperm.xlu0 %566, %v421
    %v568 = vpop.permute.xlu0 %567
    %571 = vset.pattern.permute.xlu0 1
    %572 = vperm.xlu0 %571, %v422
    %v573 = vpop.permute.xlu0 %572
    %576 = vset.pattern.permute.xlu0 1
    %577 = vperm.xlu0 %576, %v423
    %v578 = vpop.permute.xlu0 %577
    %581 = vset.pattern.permute.xlu0 1
    %582 = vperm.xlu0 %581, %v424
    %v583 = vpop.permute.xlu0 %582
    %586 = vset.pattern.permute.xlu0 1
    %587 = vperm.xlu0 %586, %v425
    %v588 = vpop.permute.xlu0 %587
    %591 = vset.pattern.permute.xlu0 1
    %592 = vperm.xlu0 %591, %v426
    %v593 = vpop.permute.xlu0 %592
    %596 = vset.pattern.permute.xlu0 1
    %597 = vperm.xlu0 %596, %v427
    %v598 = vpop.permute.xlu0 %597
    %601 = vset.pattern.permute.xlu0 1
    %602 = vperm.xlu0 %601, %v428
    %v603 = vpop.permute.xlu0 %602
    %v605 = vmul.f32 %v528, %v13
    %v606 = vmul.f32 %v533, %v15
    %v607 = vmul.f32 %v538, %v17
    %v608 = vmul.f32 %v543, %v19
    %v609 = vmul.f32 %v548, %v21
    %v610 = vmul.f32 %v553, %v23
    %v611 = vmul.f32 %v558, %v25
    %v612 = vmul.f32 %v563, %v27
    %v613 = vmul.f32 %v568, %v29
    %v614 = vmul.f32 %v573, %v31
    %v615 = vmul.f32 %v578, %v33
    %v616 = vmul.f32 %v583, %v35
    %v617 = vmul.f32 %v588, %v37
    %v618 = vmul.f32 %v593, %v39
    %v619 = vmul.f32 %v598, %v41
    %v620 = vmul.f32 %v603, %v43
    %v621 = vadd.f32 %v509, %v605
    %v622 = vadd.f32 %v510, %v606
    %v623 = vadd.f32 %v511, %v607
    %v624 = vadd.f32 %v512, %v608
    %v625 = vadd.f32 %v513, %v609
    %v626 = vadd.f32 %v514, %v610
    %v627 = vadd.f32 %v515, %v611
    %v628 = vadd.f32 %v516, %v612
    %v629 = vadd.f32 %v517, %v613
    %v630 = vadd.f32 %v518, %v614
    %v631 = vadd.f32 %v519, %v615
    %v632 = vadd.f32 %v520, %v616
    %v633 = vadd.f32 %v521, %v617
    %v634 = vadd.f32 %v522, %v618
    %v635 = vadd.f32 %v523, %v619
    %v636 = vadd.f32 %v524, %v620
    %637 = vst [vmem:[#allocation2] sm:$0xff] %v621
    %638 = vst [vmem:[#allocation2 + $0x8] sm:$0xff] %v622
    %639 = vst [vmem:[#allocation2 + $0x10] sm:$0xff] %v623
    %640 = vst [vmem:[#allocation2 + $0x18] sm:$0xff] %v624
    %641 = vst [vmem:[#allocation2 + $0x20] sm:$0xff] %v625
    %642 = vst [vmem:[#allocation2 + $0x28] sm:$0xff] %v626
    %643 = vst [vmem:[#allocation2 + $0x30] sm:$0xff] %v627
    %644 = vst [vmem:[#allocation2 + $0x38] sm:$0xff] %v628
    %645 = vst [vmem:[#allocation2 + $0x40] sm:$0xff] %v629
    %646 = vst [vmem:[#allocation2 + $0x48] sm:$0xff] %v630
    %647 = vst [vmem:[#allocation2 + $0x50] sm:$0xff] %v631
    %648 = vst [vmem:[#allocation2 + $0x58] sm:$0xff] %v632
    %649 = vst [vmem:[#allocation2 + $0x60] sm:$0xff] %v633
    %650 = vst [vmem:[#allocation2 + $0x68] sm:$0xff] %v634
    %651 = vst [vmem:[#allocation2 + $0x70] sm:$0xff] %v635
    %652 = vst [vmem:[#allocation2 + $0x78] sm:$0xff] %v636
    %v653 = vmul.f32 %v432, %v13
    %v654 = vmul.f32 %v437, %v15
    %v655 = vmul.f32 %v442, %v17
    %v656 = vmul.f32 %v447, %v19
    %v657 = vmul.f32 %v452, %v21
    %v658 = vmul.f32 %v457, %v23
    %v659 = vmul.f32 %v462, %v25
    %v660 = vmul.f32 %v467, %v27
    %v661 = vmul.f32 %v472, %v29
    %v662 = vmul.f32 %v477, %v31
    %v663 = vmul.f32 %v482, %v33
    %v664 = vmul.f32 %v487, %v35
    %v665 = vmul.f32 %v492, %v37
    %v666 = vmul.f32 %v497, %v39
    %v667 = vmul.f32 %v502, %v41
    %v668 = vmul.f32 %v507, %v43
    %v669 = vmul.f32 %v528, %v12
    %v670 = vmul.f32 %v533, %v14
    %v671 = vmul.f32 %v538, %v16
    %v672 = vmul.f32 %v543, %v18
    %v673 = vmul.f32 %v548, %v20
    %v674 = vmul.f32 %v553, %v22
    %v675 = vmul.f32 %v558, %v24
    %v676 = vmul.f32 %v563, %v26
    %v677 = vmul.f32 %v568, %v28
    %v678 = vmul.f32 %v573, %v30
    %v679 = vmul.f32 %v578, %v32
    %v680 = vmul.f32 %v583, %v34
    %v681 = vmul.f32 %v588, %v36
    %v682 = vmul.f32 %v593, %v38
    %v683 = vmul.f32 %v598, %v40
    %v684 = vmul.f32 %v603, %v42
    %v685 = vsub.f32 %v653, %v669
    %v686 = vsub.f32 %v654, %v670
    %v687 = vsub.f32 %v655, %v671
    %v688 = vsub.f32 %v656, %v672
    %v689 = vsub.f32 %v657, %v673
    %v690 = vsub.f32 %v658, %v674
    %v691 = vsub.f32 %v659, %v675
    %v692 = vsub.f32 %v660, %v676
    %v693 = vsub.f32 %v661, %v677
    %v694 = vsub.f32 %v662, %v678
    %v695 = vsub.f32 %v663, %v679
    %v696 = vsub.f32 %v664, %v680
    %v697 = vsub.f32 %v665, %v681
    %v698 = vsub.f32 %v666, %v682
    %v699 = vsub.f32 %v667, %v683
    %v700 = vsub.f32 %v668, %v684
    %701 = vst [vmem:[#allocation2 + $0x80] sm:$0xff] %v685
    %702 = vst [vmem:[#allocation2 + $0x88] sm:$0xff] %v686
    %703 = vst [vmem:[#allocation2 + $0x90] sm:$0xff] %v687
    %704 = vst [vmem:[#allocation2 + $0x98] sm:$0xff] %v688
    %705 = vst [vmem:[#allocation2 + $0xa0] sm:$0xff] %v689
    %706 = vst [vmem:[#allocation2 + $0xa8] sm:$0xff] %v690
    %707 = vst [vmem:[#allocation2 + $0xb0] sm:$0xff] %v691
    %708 = vst [vmem:[#allocation2 + $0xb8] sm:$0xff] %v692
    %709 = vst [vmem:[#allocation2 + $0xc0] sm:$0xff] %v693
    %710 = vst [vmem:[#allocation2 + $0xc8] sm:$0xff] %v694
    %711 = vst [vmem:[#allocation2 + $0xd0] sm:$0xff] %v695
    %712 = vst [vmem:[#allocation2 + $0xd8] sm:$0xff] %v696
    %713 = vst [vmem:[#allocation2 + $0xe0] sm:$0xff] %v697
    %714 = vst [vmem:[#allocation2 + $0xe8] sm:$0xff] %v698
    %715 = vst [vmem:[#allocation2 + $0xf0] sm:$0xff] %v699
    %716 = vst [vmem:[#allocation2 + $0xf8] sm:$0xff] %v700
    %v717 = vld [vmem:[#allocation2] sm:$0xff]
    %v718 = vld [vmem:[#allocation2 + $0x8] sm:$0xff]
    %v719 = vld [vmem:[#allocation2 + $0x10] sm:$0xff]
    %v720 = vld [vmem:[#allocation2 + $0x18] sm:$0xff]
    %v721 = vld [vmem:[#allocation2 + $0x20] sm:$0xff]
    %v722 = vld [vmem:[#allocation2 + $0x28] sm:$0xff]
    %v723 = vld [vmem:[#allocation2 + $0x30] sm:$0xff]
    %v724 = vld [vmem:[#allocation2 + $0x38] sm:$0xff]
    %v725 = vld [vmem:[#allocation2 + $0x40] sm:$0xff]
    %v726 = vld [vmem:[#allocation2 + $0x48] sm:$0xff]
    %v727 = vld [vmem:[#allocation2 + $0x50] sm:$0xff]
    %v728 = vld [vmem:[#allocation2 + $0x58] sm:$0xff]
    %v729 = vld [vmem:[#allocation2 + $0x60] sm:$0xff]
    %v730 = vld [vmem:[#allocation2 + $0x68] sm:$0xff]
    %v731 = vld [vmem:[#allocation2 + $0x70] sm:$0xff]
    %v732 = vld [vmem:[#allocation2 + $0x78] sm:$0xff]
    %v733 = vld [vmem:[#allocation2 + $0x80] sm:$0xff]
    %v734 = vld [vmem:[#allocation2 + $0x88] sm:$0xff]
    %v735 = vld [vmem:[#allocation2 + $0x90] sm:$0xff]
    %v736 = vld [vmem:[#allocation2 + $0x98] sm:$0xff]
    %v737 = vld [vmem:[#allocation2 + $0xa0] sm:$0xff]
    %v738 = vld [vmem:[#allocation2 + $0xa8] sm:$0xff]
    %v739 = vld [vmem:[#allocation2 + $0xb0] sm:$0xff]
    %v740 = vld [vmem:[#allocation2 + $0xb8] sm:$0xff]
    %v741 = vld [vmem:[#allocation2 + $0xc0] sm:$0xff]
    %v742 = vld [vmem:[#allocation2 + $0xc8] sm:$0xff]
    %v743 = vld [vmem:[#allocation2 + $0xd0] sm:$0xff]
    %v744 = vld [vmem:[#allocation2 + $0xd8] sm:$0xff]
    %v745 = vld [vmem:[#allocation2 + $0xe0] sm:$0xff]
    %v746 = vld [vmem:[#allocation2 + $0xe8] sm:$0xff]
    %v747 = vld [vmem:[#allocation2 + $0xf0] sm:$0xff]
    %v748 = vld [vmem:[#allocation2 + $0xf8] sm:$0xff]
    %749 = vmatprep.subr.mxu0 0.0
    %750 = vmatpush1.msra.mxu0 %v732
    %751 = vmatprep.subr.mxu0 0.0
    %752 = vmatpush1.msra.mxu0 %v731
    %753 = vmatprep.subr.mxu0 0.0
    %754 = vmatpush1.msra.mxu0 %v730
    %755 = vmatprep.subr.mxu0 0.0
    %756 = vmatpush1.msra.mxu0 %v729
    %757 = vmatprep.subr.mxu0 0.0
    %758 = vmatpush1.msra.mxu0 %v728
    %759 = vmatprep.subr.mxu0 0.0
    %760 = vmatpush1.msra.mxu0 %v727
    %761 = vmatprep.subr.mxu0 0.0
    %762 = vmatpush1.msra.mxu0 %v726
    %763 = vmatprep.subr.mxu0 0.0
    %764 = vmatpush1.msra.mxu0 %v725
    %765 = vmatprep.subr.mxu0 0.0
    %766 = vmatpush1.msra.mxu0 %v724
    %767 = vmatprep.subr.mxu0 0.0
    %768 = vmatpush1.msra.mxu0 %v723
    %769 = vmatprep.subr.mxu0 0.0
    %770 = vmatpush1.msra.mxu0 %v722
    %771 = vmatprep.subr.mxu0 0.0
    %772 = vmatpush1.msra.mxu0 %v721
    %773 = vmatprep.subr.mxu0 0.0
    %774 = vmatpush1.msra.mxu0 %v720
    %775 = vmatprep.subr.mxu0 0.0
    %776 = vmatpush1.msra.mxu0 %v719
    %777 = vmatprep.subr.mxu0 0.0
    %778 = vmatpush1.msra.mxu0 %v718
    %779 = vmatprep.subr.mxu0 0.0
    %780 = vmatpush1.msra.mxu0 %v717
    %781 = vmatprep.subr.mxu0 0.0
    %782 = vmatpush2.msra.mxu0 %v748
    %783 = vmatprep.subr.mxu0 0.0
    %784 = vmatpush2.msra.mxu0 %v747
    %785 = vmatprep.subr.mxu0 0.0
    %786 = vmatpush2.msra.mxu0 %v746
    %787 = vmatprep.subr.mxu0 0.0
    %788 = vmatpush2.msra.mxu0 %v745
    %789 = vmatprep.subr.mxu0 0.0
    %790 = vmatpush2.msra.mxu0 %v744
    %791 = vmatprep.subr.mxu0 0.0
    %792 = vmatpush2.msra.mxu0 %v743
    %793 = vmatprep.subr.mxu0 0.0
    %794 = vmatpush2.msra.mxu0 %v742
    %795 = vmatprep.subr.mxu0 0.0
    %796 = vmatpush2.msra.mxu0 %v741
    %797 = vmatprep.subr.mxu0 0.0
    %798 = vmatpush2.msra.mxu0 %v740
    %799 = vmatprep.subr.mxu0 0.0
    %800 = vmatpush2.msra.mxu0 %v739
    %801 = vmatprep.subr.mxu0 0.0
    %802 = vmatpush2.msra.mxu0 %v738
    %803 = vmatprep.subr.mxu0 0.0
    %804 = vmatpush2.msra.mxu0 %v737
    %805 = vmatprep.subr.mxu0 0.0
    %806 = vmatpush2.msra.mxu0 %v736
    %807 = vmatprep.subr.mxu0 0.0
    %808 = vmatpush2.msra.mxu0 %v735
    %809 = vmatprep.subr.mxu0 0.0
    %810 = vmatpush2.msra.mxu0 %v734
    %811 = vmatprep.subr.mxu0 0.0
    %812 = vmatpush2.msra.mxu0 %v733
    %813 = vmatprep.mubr.f32.mxu0 %v13
    %814 = vmatmul.mubr.f32.gmra.mxu0 %v12
    %v815 = vpop.f32.mrf.mxu0
    %v816 = vadd.f32 0.0, %v815
    %v817 = vpop.f32.mrf.mxu0
    %818 = vmatprep.mubr.f32.mxu0 %v15
    %819 = vmatmul.mubr.f32.gmra.mxu0 %v14
    %v820 = vpop.f32.mrf.mxu0
    %v821 = vadd.f32 0.0, %v820
    %v822 = vpop.f32.mrf.mxu0
    %823 = vmatprep.mubr.f32.mxu0 %v17
    %824 = vmatmul.mubr.f32.gmra.mxu0 %v16
    %v825 = vpop.f32.mrf.mxu0
    %v826 = vadd.f32 0.0, %v825
    %v827 = vpop.f32.mrf.mxu0
    %828 = vmatprep.mubr.f32.mxu0 %v19
    %829 = vmatmul.mubr.f32.gmra.mxu0 %v18
    %v830 = vpop.f32.mrf.mxu0
    %v831 = vadd.f32 0.0, %v830
    %v832 = vpop.f32.mrf.mxu0
    %833 = vmatprep.mubr.f32.mxu0 %v21
    %834 = vmatmul.mubr.f32.gmra.mxu0 %v20
    %v835 = vpop.f32.mrf.mxu0
    %v836 = vadd.f32 0.0, %v835
    %v837 = vpop.f32.mrf.mxu0
    %838 = vmatprep.mubr.f32.mxu0 %v23
    %839 = vmatmul.mubr.f32.gmra.mxu0 %v22
    %v840 = vpop.f32.mrf.mxu0
    %v841 = vadd.f32 0.0, %v840
    %v842 = vpop.f32.mrf.mxu0
    %843 = vmatprep.mubr.f32.mxu0 %v25
    %844 = vmatmul.mubr.f32.gmra.mxu0 %v24
    %v845 = vpop.f32.mrf.mxu0
    %v846 = vadd.f32 0.0, %v845
    %v847 = vpop.f32.mrf.mxu0
    %848 = vmatprep.mubr.f32.mxu0 %v27
    %849 = vmatmul.mubr.f32.gmra.mxu0 %v26
    %v850 = vpop.f32.mrf.mxu0
    %v851 = vadd.f32 0.0, %v850
    %v852 = vpop.f32.mrf.mxu0
    %853 = vmatprep.mubr.f32.mxu0 %v29
    %854 = vmatmul.mubr.f32.gmra.mxu0 %v28
    %v855 = vpop.f32.mrf.mxu0
    %v856 = vadd.f32 0.0, %v855
    %v857 = vpop.f32.mrf.mxu0
    %858 = vmatprep.mubr.f32.mxu0 %v31
    %859 = vmatmul.mubr.f32.gmra.mxu0 %v30
    %v860 = vpop.f32.mrf.mxu0
    %v861 = vadd.f32 0.0, %v860
    %v862 = vpop.f32.mrf.mxu0
    %863 = vmatprep.mubr.f32.mxu0 %v33
    %864 = vmatmul.mubr.f32.gmra.mxu0 %v32
    %v865 = vpop.f32.mrf.mxu0
    %v866 = vadd.f32 0.0, %v865
    %v867 = vpop.f32.mrf.mxu0
    %868 = vmatprep.mubr.f32.mxu0 %v35
    %869 = vmatmul.mubr.f32.gmra.mxu0 %v34
    %v870 = vpop.f32.mrf.mxu0
    %v871 = vadd.f32 0.0, %v870
    %v872 = vpop.f32.mrf.mxu0
    %873 = vmatprep.mubr.f32.mxu0 %v37
    %874 = vmatmul.mubr.f32.gmra.mxu0 %v36
    %v875 = vpop.f32.mrf.mxu0
    %v876 = vadd.f32 0.0, %v875
    %v877 = vpop.f32.mrf.mxu0
    %878 = vmatprep.mubr.f32.mxu0 %v39
    %879 = vmatmul.mubr.f32.gmra.mxu0 %v38
    %v880 = vpop.f32.mrf.mxu0
    %v881 = vadd.f32 0.0, %v880
    %v882 = vpop.f32.mrf.mxu0
    %883 = vmatprep.mubr.f32.mxu0 %v41
    %884 = vmatmul.mubr.f32.gmra.mxu0 %v40
    %v885 = vpop.f32.mrf.mxu0
    %v886 = vadd.f32 0.0, %v885
    %v887 = vpop.f32.mrf.mxu0
    %888 = vmatprep.mubr.f32.mxu0 %v43
    %889 = vmatmul.mubr.f32.gmra.mxu0 %v42
    %v890 = vpop.f32.mrf.mxu0
    %v891 = vadd.f32 0.0, %v890
    %v892 = vpop.f32.mrf.mxu0
    %893 = vdwg.mxu0
    %v894 = vmul.f32 %v816, 0.0078125
    %v895 = vmul.f32 %v821, 0.0078125
    %v896 = vmul.f32 %v826, 0.0078125
    %v897 = vmul.f32 %v831, 0.0078125
    %v898 = vmul.f32 %v836, 0.0078125
    %v899 = vmul.f32 %v841, 0.0078125
    %v900 = vmul.f32 %v846, 0.0078125
    %v901 = vmul.f32 %v851, 0.0078125
    %v902 = vmul.f32 %v856, 0.0078125
    %v903 = vmul.f32 %v861, 0.0078125
    %v904 = vmul.f32 %v866, 0.0078125
    %v905 = vmul.f32 %v871, 0.0078125
    %v906 = vmul.f32 %v876, 0.0078125
    %v907 = vmul.f32 %v881, 0.0078125
    %v908 = vmul.f32 %v886, 0.0078125
    %v909 = vmul.f32 %v891, 0.0078125
    %910 = vst [vmem:[#allocation3] sm:$0xff] %v894
    %911 = vst [vmem:[#allocation3 + $0x8] sm:$0xff] %v895
    %912 = vst [vmem:[#allocation3 + $0x10] sm:$0xff] %v896
    %913 = vst [vmem:[#allocation3 + $0x18] sm:$0xff] %v897
    %914 = vst [vmem:[#allocation3 + $0x20] sm:$0xff] %v898
    %915 = vst [vmem:[#allocation3 + $0x28] sm:$0xff] %v899
    %916 = vst [vmem:[#allocation3 + $0x30] sm:$0xff] %v900
    %917 = vst [vmem:[#allocation3 + $0x38] sm:$0xff] %v901
    %918 = vst [vmem:[#allocation3 + $0x40] sm:$0xff] %v902
    %919 = vst [vmem:[#allocation3 + $0x48] sm:$0xff] %v903
    %920 = vst [vmem:[#allocation3 + $0x50] sm:$0xff] %v904
    %921 = vst [vmem:[#allocation3 + $0x58] sm:$0xff] %v905
    %922 = vst [vmem:[#allocation3 + $0x60] sm:$0xff] %v906
    %923 = vst [vmem:[#allocation3 + $0x68] sm:$0xff] %v907
    %924 = vst [vmem:[#allocation3 + $0x70] sm:$0xff] %v908
    %925 = vst [vmem:[#allocation3 + $0x78] sm:$0xff] %v909
    // Predicated region
    $region10: #{tpu_custom_call.1} parent=1 // pred_check
      _
    $region11: #{tpu_custom_call.1} parent=1 // pred_check_branch
      %927 = sbr.rel (0) target = $region13
    $region12: #{tpu_custom_call.1} parent=1 // pred_region
      %s929 = ssub.s32 2048, 2048
      %930 = vsyncadd [#allocation4], %s929
      %s931 = sshll.u32 [#allocation3], 4
      %s932 = int_to_ptr.vmem [resolvable:$true] %s931
      %937 = dma.vmem_to_hbm [thread:$0]  %s932, 2048, %s2, [#allocation4], 128, 128, 8
    $region13: #{tpu_custom_call.1} parent=1 // pred_fallthru
      _
    // Predicated region
    $region14: #{tpu_custom_call.1} parent=1 // pred_check
      _
    $region15: #{tpu_custom_call.1} parent=1 // pred_check_branch
      %939 = sbr.rel (0) target = $region17
    $region16: #{tpu_custom_call.1} parent=1 // pred_region
      %940 = dma.done [#allocation4], 2048
    $region17: #{tpu_custom_call.1} parent=1 // pred_fallthru
      _
    %941 = vsyncpa [#allocation4], 1

</llo_original>
